<compile_context>
chip_gen: v7x
topology: tpu7x:2x2x1
jax: 0.10.0
libtpu: 0.0.40
codegen_flags: <defaults>
</compile_context>

<pallas_src>
import functools

import jax
import jax.numpy as jnp
from jax.experimental import pallas as pl
from jax.experimental.pallas import tpu as pltpu


def _round_up(n, m):
    return (n + m - 1) // m * m


def _pad2(a, rows, cols):
    return jnp.pad(a, ((0, rows - a.shape[0]), (0, cols - a.shape[1])))


def usernet_kernel(x_ref, w1_ref, w2_ref, w3_ref, vec_ref, o_ref, *,
                   true_d, h_pad, d_pad, o_pad):
    x = x_ref[...]                                            # (bb, d_pad) f32
    vecs = vec_ref[...]                                       # (8, max_pad) f32
    b1 = vecs[0:1, :h_pad]
    b2 = vecs[1:2, :d_pad]
    b3 = vecs[2:3, :o_pad]                                    # = beta @ W3 + b3 (folded)

    # residual_block: Linear(D, 2D) -> ReLU -> (Dropout = identity) -> Linear(2D, D)
    h = jnp.dot(x.astype(jnp.bfloat16), w1_ref[...],
                preferred_element_type=jnp.float32) + b1
    h = jnp.maximum(h, 0.0)                                   # ReLU (f32)
    # TODO(synk): training-mode Dropout(0.1) is not implemented (eval semantics).
    r = jnp.dot(h.astype(jnp.bfloat16), w2_ref[...],
                preferred_element_type=jnp.float32) + b2

    # residual add (f32); padded feature lanes of y are exactly zero.
    y = x + r

    # output_block: LayerNorm(D) (eps=1e-5, biased variance). gamma/beta are folded
    # into W3/b3 in the wrapper, so only the normalization happens here.
    inv_d = jnp.float32(1.0 / true_d)
    mean = jnp.sum(y, axis=-1, keepdims=True) * inv_d         # padded lanes are 0
    centered = y - mean
    if true_d == d_pad:
        masked = centered
    else:
        masked = centered * vecs[3:4, :d_pad]                 # resident 0/1 mask row
    var = jnp.sum(masked * masked, axis=-1, keepdims=True) * inv_d
    yn = centered * jax.lax.rsqrt(var + 1e-5)
    # Padded lanes of yn are nonzero (-mean * rsqrt), but the corresponding rows of the
    # folded W3 are zero, so they contribute nothing to the output.

    out = jnp.dot(yn.astype(jnp.bfloat16), w3_ref[...],
                  preferred_element_type=jnp.float32) + b3
    o_ref[...] = out.astype(o_ref.dtype)


def _const_spec(shape):
    """Resident (never re-DMA'd) input: constant index map + single buffer."""
    idx = lambda i: (0,) * len(shape)
    try:
        return pl.BlockSpec(shape, idx, pipeline_mode=pl.Buffered(1))
    except TypeError:  # older jax without pipeline_mode: fall back to default buffering
        return pl.BlockSpec(shape, idx)


def usernet_forward(x, params, *, block_b=1024):
    """x: (batch, input_dim) f32.  params: unpadded f32 tensors from init_params."""
    w1, b1, w2, b2, gamma, beta, w3, b3 = params
    batch, d = x.shape
    hdim = w1.shape[1]
    o = w3.shape[1]

    # Lane-dense padded feature dims (multiples of 128).
    d_pad = _round_up(max(d, 128), 128)
    h_pad = _round_up(max(hdim, 128), 128)
    o_pad = _round_up(max(o, 128), 128)
    max_pad = max(h_pad, o_pad)

    # Balanced batch blocks: pick the block count first, then split evenly (8-aligned),
    # so there is never a mostly-padding trailing tile.  Force >= 2 blocks when the
    # batch is large enough that per-block work dominates the ~0.35us step overhead,
    # so the "parallel" axis actually spans both v7x TensorCores.
    n_blocks = pl.cdiv(batch, block_b)
    if n_blocks == 1 and batch >= 512:
        n_blocks = 2
    bb = _round_up(pl.cdiv(batch, n_blocks), 8)
    batch_p = n_blocks * bb

    # Fold LayerNorm affine into the output Linear (computed in f32, then bf16 cast):
    #   W3' = diag(gamma) @ W3,   b3' = beta @ W3 + b3.
    gamma_v = gamma.reshape(-1).astype(jnp.float32)
    beta_v = beta.reshape(-1).astype(jnp.float32)
    w3_f32 = w3.astype(jnp.float32)
    w3f = gamma_v[:, None] * w3_f32                            # (d, o)
    b3f = beta_v @ w3_f32 + b3.reshape(-1).astype(jnp.float32)  # (o,)

    # Pad operands; weights in bf16 (f32 accumulation in-kernel).
    xp = jnp.pad(x.astype(jnp.float32), ((0, batch_p - batch), (0, d_pad - d)))
    w1p = _pad2(w1.astype(jnp.float32), d_pad, h_pad).astype(jnp.bfloat16)
    w2p = _pad2(w2.astype(jnp.float32), h_pad, d_pad).astype(jnp.bfloat16)
    w3p = _pad2(w3f, d_pad, o_pad).astype(jnp.bfloat16)

    # Pack all (1, N) vectors + the variance mask into ONE resident (8, max_pad) array.
    vecs = jnp.zeros((8, max_pad), jnp.float32)
    vecs = vecs.at[0, :hdim].set(b1.reshape(-1).astype(jnp.float32))
    vecs = vecs.at[1, :d].set(b2.reshape(-1).astype(jnp.float32))
    vecs = vecs.at[2, :o].set(b3f)
    vecs = vecs.at[3, :d].set(1.0)                             # variance mask row

    grid = (batch_p // bb,)
    in_specs = [
        pl.BlockSpec((bb, d_pad), lambda i: (i, 0)),           # x (batch-tiled)
        _const_spec((d_pad, h_pad)),                           # w1 (resident)
        _const_spec((h_pad, d_pad)),                           # w2 (resident)
        _const_spec((d_pad, o_pad)),                           # w3 (folded, resident)
        _const_spec((8, max_pad)),                             # packed biases + mask
    ]
    out_specs = pl.BlockSpec((bb, o_pad), lambda i: (i, 0))

    # VMEM budget: resident weights (counted x2 for safety in case single-buffering is
    # unavailable), double-buffered activation tiles, and in-kernel intermediates
    # (h f32+bf16, y/centered/yn f32, bf16 casts, out f32), plus fixed headroom.
    weight_bytes = (w1p.size + w2p.size + w3p.size) * 2 + vecs.size * 4
    act_bytes = 2 * bb * (d_pad + o_pad) * 4
    inter_bytes = bb * (3 * h_pad + 5 * d_pad + 2 * o_pad) * 4
    need = 2 * weight_bytes + act_bytes + inter_bytes + (8 << 20)
    try:
        phys_vmem = int(pltpu.get_tpu_info().vmem_capacity_bytes)
    except Exception:
        phys_vmem = 64 << 20                                   # conservative (v7x per-TC)
    vmem_limit = int(min(need, int(phys_vmem * 0.75)))         # ~25% headroom

    cost = pl.CostEstimate(
        flops=2 * batch_p * (d_pad * h_pad + h_pad * d_pad + d_pad * o_pad),
        transcendentals=batch_p,
        bytes_accessed=xp.size * 4 + batch_p * o_pad * 4 + weight_bytes,
    )

    out_p = pl.pallas_call(
        functools.partial(usernet_kernel, true_d=d, h_pad=h_pad, d_pad=d_pad,
                          o_pad=o_pad),
        out_shape=jax.ShapeDtypeStruct((batch_p, o_pad), jnp.float32),
        grid=grid,
        in_specs=in_specs,
        out_specs=out_specs,
        compiler_params=pltpu.CompilerParams(
            dimension_semantics=("parallel",),
            vmem_limit_bytes=vmem_limit),
        cost_estimate=cost,
    )(xp, w1p, w2p, w3p, vecs)

    return out_p[:batch, :o]


def init_params(key, input_dim, output_dim):
    ks = jax.random.split(key, 8)
    hidden = input_dim * 2
    w1 = jax.random.normal(ks[0], (input_dim, hidden), jnp.float32) * 0.05
    b1 = jax.random.normal(ks[1], (1, hidden), jnp.float32) * 0.05
    w2 = jax.random.normal(ks[2], (hidden, input_dim), jnp.float32) * 0.05
    b2 = jax.random.normal(ks[3], (1, input_dim), jnp.float32) * 0.05
    # Non-trivial LayerNorm affine so the W3/b3 fold is actually exercised.
    gamma = 1.0 + jax.random.normal(ks[4], (1, input_dim), jnp.float32) * 0.05
    beta = jax.random.normal(ks[5], (1, input_dim), jnp.float32) * 0.05
    w3 = jax.random.normal(ks[6], (input_dim, output_dim), jnp.float32) * 0.05
    b3 = jax.random.normal(ks[7], (1, output_dim), jnp.float32) * 0.05
    return (w1, b1, w2, b2, gamma, beta, w3, b3)


def usernet_ref(x, params):
    """Pure-JAX f32 reference with exact module semantics (no fold, no bf16)."""
    w1, b1, w2, b2, gamma, beta, w3, b3 = params
    h = jnp.maximum(x @ w1 + b1, 0.0)
    r = h @ w2 + b2
    y = x + r
    mean = jnp.mean(y, axis=-1, keepdims=True)
    var = jnp.mean((y - mean) ** 2, axis=-1, keepdims=True)
    yn = (y - mean) / jnp.sqrt(var + 1e-5)
    yn = yn * gamma + beta
    return yn @ w3 + b3


def usernet_ref_matched(x, params):
    """Reference that mirrors the kernel numerics (gamma/beta fold, bf16 operands,
    f32 accumulation, rsqrt) for a tight precision-matched check."""
    w1, b1, w2, b2, gamma, beta, w3, b3 = params
    gamma_v = gamma.reshape(-1)
    beta_v = beta.reshape(-1)
    w3f = gamma_v[:, None] * w3
    b3f = beta_v @ w3 + b3.reshape(-1)

    def mm(a, w):
        return jnp.dot(a.astype(jnp.bfloat16), w.astype(jnp.bfloat16),
                       preferred_element_type=jnp.float32)

    h = jnp.maximum(mm(x, w1) + b1, 0.0)
    r = mm(h, w2) + b2
    y = x + r
    mean = jnp.mean(y, axis=-1, keepdims=True)
    c = y - mean
    var = jnp.mean(c * c, axis=-1, keepdims=True)
    yn = c * jax.lax.rsqrt(var + 1e-5)
    return mm(yn, w3f) + b3f


if __name__ == "__main__":
    input_dim = 32    # topic_num
    output_dim = 16
    batch = 8

    key = jax.random.PRNGKey(0)
    kx, kp = jax.random.split(key)
    x = jax.random.normal(kx, (batch, input_dim), jnp.float32)
    params = init_params(kp, input_dim, output_dim)

    fwd = jax.jit(usernet_forward)
    out = jax.block_until_ready(fwd(x, params))
    assert out.shape == (batch, output_dim)

    # Primary gate: precision-matched reference (fold + bf16 operands, f32 accumulation).
    ref_m = usernet_ref_matched(x, params)
    assert jnp.allclose(out, ref_m, atol=1e-3, rtol=1e-3), \
        float(jnp.max(jnp.abs(out - ref_m)))

    # Secondary: full-f32 module semantics (looser tolerance covers bf16 weight rounding
    # and the affine fold riding in bf16 W3).
    ref_f = usernet_ref(x, params)
    assert jnp.allclose(out, ref_f, atol=2e-2, rtol=2e-2), \
        float(jnp.max(jnp.abs(out - ref_f)))

    print("KERNEL_OK")
</pallas_src>

<mosaic_0001>
module attributes {stable_mosaic.version = 11 : i64} {
  func.func @usernet_kernel(%arg0: i32, %arg1: memref<8x128xf32, #tpu.memory_space<vmem>>, %arg2: memref<128x128xbf16, #tpu.memory_space<vmem>>, %arg3: memref<128x128xbf16, #tpu.memory_space<vmem>>, %arg4: memref<128x128xbf16, #tpu.memory_space<vmem>>, %arg5: memref<8x128xf32, #tpu.memory_space<vmem>>, %arg6: memref<8x128xf32, #tpu.memory_space<vmem>>) attributes {dimension_semantics = [#tpu.dimension_semantics<parallel>], iteration_bounds = array<i64: 1>, scalar_prefetch = 0 : i64, scratch_operands = 0 : i64, tpu.core_type = #tpu.core_type<tc>, window_params = [{transform_indices = @transform_0, window_bounds = array<i64: 8, 128>}, {pipeline_mode = #tpu.pipeline_mode<synchronous>, transform_indices = @transform_1, window_bounds = array<i64: 128, 128>}, {pipeline_mode = #tpu.pipeline_mode<synchronous>, transform_indices = @transform_2, window_bounds = array<i64: 128, 128>}, {pipeline_mode = #tpu.pipeline_mode<synchronous>, transform_indices = @transform_3, window_bounds = array<i64: 128, 128>}, {pipeline_mode = #tpu.pipeline_mode<synchronous>, transform_indices = @transform_4, window_bounds = array<i64: 8, 128>}, {transform_indices = @transform_5, window_bounds = array<i64: 8, 128>}]} {
    %c0 = arith.constant 0 : index
    %c0_0 = arith.constant 0 : index
    %0 = vector.load %arg1[%c0, %c0_0] : memref<8x128xf32, #tpu.memory_space<vmem>>, vector<8x128xf32>
    %c0_1 = arith.constant 0 : index
    %c0_2 = arith.constant 0 : index
    %1 = vector.load %arg5[%c0_1, %c0_2] : memref<8x128xf32, #tpu.memory_space<vmem>>, vector<8x128xf32>
    %2 = vector.extract_strided_slice %1 {offsets = [0, 0], sizes = [1, 128], strides = [1, 1]} : vector<8x128xf32> to vector<1x128xf32>
    %3 = vector.extract_strided_slice %1 {offsets = [1, 0], sizes = [1, 128], strides = [1, 1]} : vector<8x128xf32> to vector<1x128xf32>
    %4 = vector.extract_strided_slice %1 {offsets = [2, 0], sizes = [1, 128], strides = [1, 1]} : vector<8x128xf32> to vector<1x128xf32>
    %5 = arith.truncf %0 : vector<8x128xf32> to vector<8x128xbf16>
    %c0_3 = arith.constant 0 : index
    %c0_4 = arith.constant 0 : index
    %6 = vector.load %arg2[%c0_3, %c0_4] : memref<128x128xbf16, #tpu.memory_space<vmem>>, vector<128x128xbf16>
    %cst = arith.constant dense<0.000000e+00> : vector<8x128xf32>
    %7 = tpu.matmul %5, %6, %cst {dimension_numbers = #tpu.dot_dimension_numbers<[1], [0], [0], [1], [0, 0, 1, 1], [], []>} : vector<8x128xbf16>, vector<128x128xbf16>, vector<8x128xf32> -> vector<8x128xf32>
    %8 = vector.broadcast %2 : vector<1x128xf32> to vector<8x128xf32>
    %9 = arith.addf %7, %8 : vector<8x128xf32>
    %cst_5 = arith.constant 0.000000e+00 : f32
    %10 = vector.broadcast %cst_5 : f32 to vector<8x128xf32>
    %11 = arith.maximumf %9, %10 : vector<8x128xf32>
    %12 = arith.truncf %11 : vector<8x128xf32> to vector<8x128xbf16>
    %c0_6 = arith.constant 0 : index
    %c0_7 = arith.constant 0 : index
    %13 = vector.load %arg3[%c0_6, %c0_7] : memref<128x128xbf16, #tpu.memory_space<vmem>>, vector<128x128xbf16>
    %cst_8 = arith.constant dense<0.000000e+00> : vector<8x128xf32>
    %14 = tpu.matmul %12, %13, %cst_8 {dimension_numbers = #tpu.dot_dimension_numbers<[1], [0], [0], [1], [0, 0, 1, 1], [], []>} : vector<8x128xbf16>, vector<128x128xbf16>, vector<8x128xf32> -> vector<8x128xf32>
    %15 = vector.broadcast %3 : vector<1x128xf32> to vector<8x128xf32>
    %16 = arith.addf %14, %15 : vector<8x128xf32>
    %17 = arith.addf %0, %16 : vector<8x128xf32>
    %cst_9 = arith.constant dense<0.000000e+00> : vector<8xf32>
    %18 = vector.multi_reduction <add>, %17, %cst_9 [1] : vector<8x128xf32> to vector<8xf32>
    %19 = vector.shape_cast %18 : vector<8xf32> to vector<8x1xf32>
    %cst_10 = arith.constant 3.125000e-02 : f32
    %20 = vector.broadcast %cst_10 : f32 to vector<8x1xf32>
    %21 = arith.mulf %19, %20 : vector<8x1xf32>
    %22 = vector.broadcast %21 : vector<8x1xf32> to vector<8x128xf32>
    %23 = arith.subf %17, %22 : vector<8x128xf32>
    %24 = vector.extract_strided_slice %1 {offsets = [3, 0], sizes = [1, 128], strides = [1, 1]} : vector<8x128xf32> to vector<1x128xf32>
    %25 = vector.broadcast %24 : vector<1x128xf32> to vector<8x128xf32>
    %26 = arith.mulf %23, %25 : vector<8x128xf32>
    %27 = arith.mulf %26, %26 : vector<8x128xf32>
    %cst_11 = arith.constant dense<0.000000e+00> : vector<8xf32>
    %28 = vector.multi_reduction <add>, %27, %cst_11 [1] : vector<8x128xf32> to vector<8xf32>
    %29 = vector.shape_cast %28 : vector<8xf32> to vector<8x1xf32>
    %cst_12 = arith.constant 3.125000e-02 : f32
    %30 = vector.broadcast %cst_12 : f32 to vector<8x1xf32>
    %31 = arith.mulf %29, %30 : vector<8x1xf32>
    %cst_13 = arith.constant 9.99999974E-6 : f32
    %32 = vector.broadcast %cst_13 : f32 to vector<8x1xf32>
    %33 = arith.addf %31, %32 : vector<8x1xf32>
    %34 = math.rsqrt %33 : vector<8x1xf32>
    %35 = vector.broadcast %34 : vector<8x1xf32> to vector<8x128xf32>
    %36 = arith.mulf %23, %35 : vector<8x128xf32>
    %37 = arith.truncf %36 : vector<8x128xf32> to vector<8x128xbf16>
    %c0_14 = arith.constant 0 : index
    %c0_15 = arith.constant 0 : index
    %38 = vector.load %arg4[%c0_14, %c0_15] : memref<128x128xbf16, #tpu.memory_space<vmem>>, vector<128x128xbf16>
    %cst_16 = arith.constant dense<0.000000e+00> : vector<8x128xf32>
    %39 = tpu.matmul %37, %38, %cst_16 {dimension_numbers = #tpu.dot_dimension_numbers<[1], [0], [0], [1], [0, 0, 1, 1], [], []>} : vector<8x128xbf16>, vector<128x128xbf16>, vector<8x128xf32> -> vector<8x128xf32>
    %40 = vector.broadcast %4 : vector<1x128xf32> to vector<8x128xf32>
    %41 = arith.addf %39, %40 : vector<8x128xf32>
    %c0_17 = arith.constant 0 : index
    %c0_18 = arith.constant 0 : index
    %42 = vector.load %arg6[%c0_17, %c0_18] : memref<8x128xf32, #tpu.memory_space<vmem>>, vector<8x128xf32>
    tpu.vector_store %arg6[%c0_17, %c0_18], %41 {strides = array<i32>} : memref<8x128xf32, #tpu.memory_space<vmem>>, vector<8x128xf32>,
    return
  }
  func.func @transform_0(%arg0: i32) -> (i32, i32) {
    %c0_i32 = arith.constant 0 : i32
    %c0_i32_0 = arith.constant 0 : i32
    return %arg0, %c0_i32 : i32, i32
  }
  func.func @transform_1(%arg0: i32) -> (i32, i32) {
    %c0_i32 = arith.constant 0 : i32
    %c0_i32_0 = arith.constant 0 : i32
    %c0_i32_1 = arith.constant 0 : i32
    return %c0_i32, %c0_i32_0 : i32, i32
  }
  func.func @transform_2(%arg0: i32) -> (i32, i32) {
    %c0_i32 = arith.constant 0 : i32
    %c0_i32_0 = arith.constant 0 : i32
    %c0_i32_1 = arith.constant 0 : i32
    return %c0_i32, %c0_i32_0 : i32, i32
  }
  func.func @transform_3(%arg0: i32) -> (i32, i32) {
    %c0_i32 = arith.constant 0 : i32
    %c0_i32_0 = arith.constant 0 : i32
    %c0_i32_1 = arith.constant 0 : i32
    return %c0_i32, %c0_i32_0 : i32, i32
  }
  func.func @transform_4(%arg0: i32) -> (i32, i32) {
    %c0_i32 = arith.constant 0 : i32
    %c0_i32_0 = arith.constant 0 : i32
    %c0_i32_1 = arith.constant 0 : i32
    return %c0_i32, %c0_i32_0 : i32, i32
  }
  func.func @transform_5(%arg0: i32) -> (i32, i32) {
    %c0_i32 = arith.constant 0 : i32
    %c0_i32_0 = arith.constant 0 : i32
    return %arg0, %c0_i32 : i32, i32
  }
}

</mosaic_0001>

<llo_original>
// kernel: usernet_forward.1
$region0: #{usernet_forward.1}
  #allocation0 [shape = 'u32[]', space=smem, size = 0x4, offset = 0x4, fixed_abs, tag = 'smem constant byte address 0x4 - core index']
  #allocation1 [shape = 'u32[144,128]{1,0:T(1,128)}', space=vmem, size = 0x12000, scoped, tag = 'internal scratch']
  %s0 = inlined_call_operand.vmem [shape: f32[8,128], index: 0, kind: input, shape index: {}]
  %s1 = inlined_call_operand.vmem [shape: bf16[128,128], index: 1, kind: input, shape index: {}]
  %s2 = inlined_call_operand.vmem [shape: bf16[128,128], index: 2, kind: input, shape index: {}]
  %s3 = inlined_call_operand.vmem [shape: bf16[128,128], index: 3, kind: input, shape index: {}]
  %s4 = inlined_call_operand.vmem [shape: f32[8,128], index: 4, kind: input, shape index: {}]
  %s5 = inlined_call_operand.hbm [shape: f32[8,128], index: 5, kind: output, shape index: {}]
  %s6 = sld [smem:[#allocation0]]
  $region30: #{usernet_forward.1} parent=0
    _
  %s8 = ssub.s32 1, %s6
  %s9 = scalar_select 0, %s8, %s6
  $region1: #{usernet_forward.1} parent=0
    #allocation2 [shape = 'u8[4096]{0}', space=vmem, size = 0x1000, scoped, tag = 'output window, operand 0, single buffered']
    #allocation3 [shape = 's32[1]{0}', space=sflag, size = 0x4, scoped, tag = 'scoped memory for usernet_forward.1']
    %10 = vsyncpa [#allocation3], 0
    // Predicated region
    $region2: #{usernet_forward.1} parent=1 // pred_check
      _
    $region3: #{usernet_forward.1} parent=1 // pred_check_branch
      %12 = sbr.rel (0) target = $region5
    $region4: #{usernet_forward.1} parent=1 // pred_region
      _
    $region5: #{usernet_forward.1} parent=1 // pred_fallthru
      _
    // Predicated region
    $region6: #{usernet_forward.1} parent=1 // pred_check
      _
    $region7: #{usernet_forward.1} parent=1 // pred_check_branch
      %14 = sbr.rel (0) target = $region9
    $region8: #{usernet_forward.1} parent=1 // pred_region
      _
    $region9: #{usernet_forward.1} parent=1 // pred_fallthru
      _
    // Predicated region
    $region10: #{usernet_forward.1} parent=1 // pred_check
      _
    $region11: #{usernet_forward.1} parent=1 // pred_check_branch
      %16 = sbr.rel (0) target = $region13
    $region12: #{usernet_forward.1} parent=1 // pred_region
      _
    $region13: #{usernet_forward.1} parent=1 // pred_fallthru
      _
    // Predicated region
    $region14: #{usernet_forward.1} parent=1 // pred_check
      _
    $region15: #{usernet_forward.1} parent=1 // pred_check_branch
      %18 = sbr.rel (0) target = $region17
    $region16: #{usernet_forward.1} parent=1 // pred_region
      _
    $region17: #{usernet_forward.1} parent=1 // pred_fallthru
      _
    // Predicated region
    $region18: #{usernet_forward.1} parent=1 // pred_check
      _
    $region19: #{usernet_forward.1} parent=1 // pred_check_branch
      %20 = sbr.rel (0) target = $region21
    $region20: #{usernet_forward.1} parent=1 // pred_region
      _
    $region21: #{usernet_forward.1} parent=1 // pred_fallthru
      _
    %v22 = vld [vmem:[%s0] sm:$0xff]
    %v23 = vld [vmem:[%s4] sm:$0xff]
    %v24 = vpack.c.bf16 %v22, %v22
    %v25 = vld [vmem:[%s1] sm:$0xf]
    %v26 = vld [vmem:[%s1 + $0x4] sm:$0xf]
    %v27 = vld [vmem:[%s1 + $0x8] sm:$0xf]
    %v28 = vld [vmem:[%s1 + $0xc] sm:$0xf]
    %v29 = vld [vmem:[%s1 + $0x10] sm:$0xf]
    %v30 = vld [vmem:[%s1 + $0x14] sm:$0xf]
    %v31 = vld [vmem:[%s1 + $0x18] sm:$0xf]
    %v32 = vld [vmem:[%s1 + $0x1c] sm:$0xf]
    %v33 = vld [vmem:[%s1 + $0x20] sm:$0xf]
    %v34 = vld [vmem:[%s1 + $0x24] sm:$0xf]
    %v35 = vld [vmem:[%s1 + $0x28] sm:$0xf]
    %v36 = vld [vmem:[%s1 + $0x2c] sm:$0xf]
    %v37 = vld [vmem:[%s1 + $0x30] sm:$0xf]
    %v38 = vld [vmem:[%s1 + $0x34] sm:$0xf]
    %v39 = vld [vmem:[%s1 + $0x38] sm:$0xf]
    %v40 = vld [vmem:[%s1 + $0x3c] sm:$0xf]
    %v41 = vlaneseq
    %v42 = vshrl.u32 %v41, 7
    %v43 = vsub.s32 0, %v42
    %v44 = vrot.slane %v23, %v43
    %v61 = vunpack.c.l.b16 %v25
    %v62 = vunpack.c.l.b16 %v26
    %v63 = vunpack.c.l.b16 %v27
    %v64 = vunpack.c.l.b16 %v28
    %v65 = vunpack.c.l.b16 %v29
    %v66 = vunpack.c.l.b16 %v30
    %v67 = vunpack.c.l.b16 %v31
    %v68 = vunpack.c.l.b16 %v32
    %v69 = vunpack.c.l.b16 %v33
    %v70 = vunpack.c.l.b16 %v34
    %v71 = vunpack.c.l.b16 %v35
    %v72 = vunpack.c.l.b16 %v36
    %v73 = vunpack.c.l.b16 %v37
    %v74 = vunpack.c.l.b16 %v38
    %v75 = vunpack.c.l.b16 %v39
    %v76 = vunpack.c.l.b16 %v40
    %v77 = vpack.c.b16 %v62, %v61
    %v78 = vpack.c.b16 %v64, %v63
    %v79 = vpack.c.b16 %v66, %v65
    %v80 = vpack.c.b16 %v68, %v67
    %v81 = vpack.c.b16 %v70, %v69
    %v82 = vpack.c.b16 %v72, %v71
    %v83 = vpack.c.b16 %v74, %v73
    %v84 = vpack.c.b16 %v76, %v75
    %93 = vmatprep.subr.bf16.mxu0 0
    %94 = vmatpush1.bf16.msra.mxu0 %v77
    %95 = vmatprep.subr.bf16.mxu0 0
    %96 = vmatpush1.bf16.msra.mxu0 %v78
    %97 = vmatprep.subr.bf16.mxu0 0
    %98 = vmatpush1.bf16.msra.mxu0 %v79
    %99 = vmatprep.subr.bf16.mxu0 0
    %100 = vmatpush1.bf16.msra.mxu0 %v80
    %101 = vmatprep.subr.bf16.mxu0 0
    %102 = vmatpush1.bf16.msra.mxu0 %v81
    %103 = vmatprep.subr.bf16.mxu0 0
    %104 = vmatpush1.bf16.msra.mxu0 %v82
    %105 = vmatprep.subr.bf16.mxu0 0
    %106 = vmatpush1.bf16.msra.mxu0 %v83
    %107 = vmatprep.subr.bf16.mxu0 0
    %108 = vmatpush1.bf16.msra.mxu0 %v84
    %109 = vmatprep.subr.bf16.mxu0 0
    %110 = vmatpush1.bf16.msra.mxu0 0
    %111 = vmatprep.subr.bf16.mxu0 0
    %112 = vmatpush1.bf16.msra.mxu0 0
    %113 = vmatprep.subr.bf16.mxu0 0
    %114 = vmatpush1.bf16.msra.mxu0 0
    %115 = vmatprep.subr.bf16.mxu0 0
    %116 = vmatpush1.bf16.msra.mxu0 0
    %117 = vmatprep.subr.bf16.mxu0 0
    %118 = vmatpush1.bf16.msra.mxu0 0
    %119 = vmatprep.subr.bf16.mxu0 0
    %120 = vmatpush1.bf16.msra.mxu0 0
    %121 = vmatprep.subr.bf16.mxu0 0
    %122 = vmatpush1.bf16.msra.mxu0 0
    %123 = vmatprep.subr.bf16.mxu0 0
    %124 = vmatpush1.bf16.msra.mxu0 0
    %125 = vmatprep.mubr.bf16.mxu0 0
    %126 = vmatmul.mubr.bf16.gmra.mrb[0].mxu0 %v24
    %v127 = vpop.f32.mrb[0].mxu0
    %v128 = vadd.f32 %v44, %v127
    %v129 = vpop.f32.mrb[0].mxu0
    %v130 = vpop.f32.mrb[0].mxu0
    %v131 = vpop.f32.mrb[0].mxu0
    %132 = vdwg.mxu0
    %v133 = vmax.f32 %v128, 0.0
    %v134 = vpack.c.bf16 %v133, %v133
    %v135 = vld [vmem:[%s2] sm:$0xf]
    %v136 = vld [vmem:[%s2 + $0x4] sm:$0xf]
    %v137 = vld [vmem:[%s2 + $0x8] sm:$0xf]
    %v138 = vld [vmem:[%s2 + $0xc] sm:$0xf]
    %v139 = vld [vmem:[%s2 + $0x10] sm:$0xf]
    %v140 = vld [vmem:[%s2 + $0x14] sm:$0xf]
    %v141 = vld [vmem:[%s2 + $0x18] sm:$0xf]
    %v142 = vld [vmem:[%s2 + $0x1c] sm:$0xf]
    %v143 = vld [vmem:[%s2 + $0x20] sm:$0xf]
    %v144 = vld [vmem:[%s2 + $0x24] sm:$0xf]
    %v145 = vld [vmem:[%s2 + $0x28] sm:$0xf]
    %v146 = vld [vmem:[%s2 + $0x2c] sm:$0xf]
    %v147 = vld [vmem:[%s2 + $0x30] sm:$0xf]
    %v148 = vld [vmem:[%s2 + $0x34] sm:$0xf]
    %v149 = vld [vmem:[%s2 + $0x38] sm:$0xf]
    %v150 = vld [vmem:[%s2 + $0x3c] sm:$0xf]
    %v151 = vlaneseq
    %v152 = vshrl.u32 %v151, 7
    %v153 = vsub.s32 1, %v152
    %v154 = vrot.slane %v23, %v153
    %v171 = vunpack.c.l.b16 %v135
    %v172 = vunpack.c.l.b16 %v136
    %v173 = vunpack.c.l.b16 %v137
    %v174 = vunpack.c.l.b16 %v138
    %v175 = vunpack.c.l.b16 %v139
    %v176 = vunpack.c.l.b16 %v140
    %v177 = vunpack.c.l.b16 %v141
    %v178 = vunpack.c.l.b16 %v142
    %v179 = vunpack.c.l.b16 %v143
    %v180 = vunpack.c.l.b16 %v144
    %v181 = vunpack.c.l.b16 %v145
    %v182 = vunpack.c.l.b16 %v146
    %v183 = vunpack.c.l.b16 %v147
    %v184 = vunpack.c.l.b16 %v148
    %v185 = vunpack.c.l.b16 %v149
    %v186 = vunpack.c.l.b16 %v150
    %v187 = vpack.c.b16 %v172, %v171
    %v188 = vpack.c.b16 %v174, %v173
    %v189 = vpack.c.b16 %v176, %v175
    %v190 = vpack.c.b16 %v178, %v177
    %v191 = vpack.c.b16 %v180, %v179
    %v192 = vpack.c.b16 %v182, %v181
    %v193 = vpack.c.b16 %v184, %v183
    %v194 = vpack.c.b16 %v186, %v185
    %203 = vmatprep.subr.bf16.mxu0 0
    %204 = vmatpush1.bf16.msra.mxu0 %v187
    %205 = vmatprep.subr.bf16.mxu0 0
    %206 = vmatpush1.bf16.msra.mxu0 %v188
    %207 = vmatprep.subr.bf16.mxu0 0
    %208 = vmatpush1.bf16.msra.mxu0 %v189
    %209 = vmatprep.subr.bf16.mxu0 0
    %210 = vmatpush1.bf16.msra.mxu0 %v190
    %211 = vmatprep.subr.bf16.mxu0 0
    %212 = vmatpush1.bf16.msra.mxu0 %v191
    %213 = vmatprep.subr.bf16.mxu0 0
    %214 = vmatpush1.bf16.msra.mxu0 %v192
    %215 = vmatprep.subr.bf16.mxu0 0
    %216 = vmatpush1.bf16.msra.mxu0 %v193
    %217 = vmatprep.subr.bf16.mxu0 0
    %218 = vmatpush1.bf16.msra.mxu0 %v194
    %219 = vmatprep.subr.bf16.mxu0 0
    %220 = vmatpush1.bf16.msra.mxu0 0
    %221 = vmatprep.subr.bf16.mxu0 0
    %222 = vmatpush1.bf16.msra.mxu0 0
    %223 = vmatprep.subr.bf16.mxu0 0
    %224 = vmatpush1.bf16.msra.mxu0 0
    %225 = vmatprep.subr.bf16.mxu0 0
    %226 = vmatpush1.bf16.msra.mxu0 0
    %227 = vmatprep.subr.bf16.mxu0 0
    %228 = vmatpush1.bf16.msra.mxu0 0
    %229 = vmatprep.subr.bf16.mxu0 0
    %230 = vmatpush1.bf16.msra.mxu0 0
    %231 = vmatprep.subr.bf16.mxu0 0
    %232 = vmatpush1.bf16.msra.mxu0 0
    %233 = vmatprep.subr.bf16.mxu0 0
    %234 = vmatpush1.bf16.msra.mxu0 0
    %235 = vmatprep.mubr.bf16.mxu0 0
    %236 = vmatmul.mubr.bf16.gmra.mrb[0].mxu0 %v134
    %v237 = vpop.f32.mrb[0].mxu0
    %v238 = vadd.f32 %v154, %v237
    %v239 = vpop.f32.mrb[0].mxu0
    %v240 = vpop.f32.mrb[0].mxu0
    %v241 = vpop.f32.mrb[0].mxu0
    %242 = vdwg.mxu0
    %v243 = vadd.f32 %v22, %v238
    %244 = vadd.xlane.f32.xlu0 %v243
    %v245 = vpop.xlane.xlu0 %244
    %v246 = vmul.f32 %v245, 0.03125
    %v247 = vsub.f32 %v243, %v246
    %v248 = vlaneseq
    %v249 = vshrl.u32 %v248, 7
    %v250 = vsub.s32 3, %v249
    %v251 = vrot.slane %v23, %v250
    %v252 = vmul.f32 %v247, %v251
    %v253 = vmul.f32 %v252, %v252
    %254 = vadd.xlane.f32.xlu0 %v253
    %v255 = vpop.xlane.xlu0 %254
    %v256 = vmul.f32 %v255, 0.03125
    %v257 = vadd.f32 %v256, 1e-05
    %v258 = vrsqrt.pop %v257
    %v259 = vmul.f32 %v247, %v258
    %v260 = vpack.c.bf16 %v259, %v259
    %v261 = vld [vmem:[%s3] sm:$0xf]
    %v262 = vld [vmem:[%s3 + $0x4] sm:$0xf]
    %v263 = vld [vmem:[%s3 + $0x8] sm:$0xf]
    %v264 = vld [vmem:[%s3 + $0xc] sm:$0xf]
    %v265 = vld [vmem:[%s3 + $0x10] sm:$0xf]
    %v266 = vld [vmem:[%s3 + $0x14] sm:$0xf]
    %v267 = vld [vmem:[%s3 + $0x18] sm:$0xf]
    %v268 = vld [vmem:[%s3 + $0x1c] sm:$0xf]
    %v269 = vld [vmem:[%s3 + $0x20] sm:$0xf]
    %v270 = vld [vmem:[%s3 + $0x24] sm:$0xf]
    %v271 = vld [vmem:[%s3 + $0x28] sm:$0xf]
    %v272 = vld [vmem:[%s3 + $0x2c] sm:$0xf]
    %v273 = vld [vmem:[%s3 + $0x30] sm:$0xf]
    %v274 = vld [vmem:[%s3 + $0x34] sm:$0xf]
    %v275 = vld [vmem:[%s3 + $0x38] sm:$0xf]
    %v276 = vld [vmem:[%s3 + $0x3c] sm:$0xf]
    %v277 = vlaneseq
    %v278 = vshrl.u32 %v277, 7
    %v279 = vsub.s32 2, %v278
    %v280 = vrot.slane %v23, %v279
    %v297 = vunpack.c.l.b16 %v261
    %v298 = vunpack.c.l.b16 %v262
    %v299 = vunpack.c.l.b16 %v263
    %v300 = vunpack.c.l.b16 %v264
    %v301 = vunpack.c.l.b16 %v265
    %v302 = vunpack.c.l.b16 %v266
    %v303 = vunpack.c.l.b16 %v267
    %v304 = vunpack.c.l.b16 %v268
    %v305 = vunpack.c.l.b16 %v269
    %v306 = vunpack.c.l.b16 %v270
    %v307 = vunpack.c.l.b16 %v271
    %v308 = vunpack.c.l.b16 %v272
    %v309 = vunpack.c.l.b16 %v273
    %v310 = vunpack.c.l.b16 %v274
    %v311 = vunpack.c.l.b16 %v275
    %v312 = vunpack.c.l.b16 %v276
    %v313 = vpack.c.b16 %v298, %v297
    %v314 = vpack.c.b16 %v300, %v299
    %v315 = vpack.c.b16 %v302, %v301
    %v316 = vpack.c.b16 %v304, %v303
    %v317 = vpack.c.b16 %v306, %v305
    %v318 = vpack.c.b16 %v308, %v307
    %v319 = vpack.c.b16 %v310, %v309
    %v320 = vpack.c.b16 %v312, %v311
    %329 = vmatprep.subr.bf16.mxu0 0
    %330 = vmatpush1.bf16.msra.mxu0 %v313
    %331 = vmatprep.subr.bf16.mxu0 0
    %332 = vmatpush1.bf16.msra.mxu0 %v314
    %333 = vmatprep.subr.bf16.mxu0 0
    %334 = vmatpush1.bf16.msra.mxu0 %v315
    %335 = vmatprep.subr.bf16.mxu0 0
    %336 = vmatpush1.bf16.msra.mxu0 %v316
    %337 = vmatprep.subr.bf16.mxu0 0
    %338 = vmatpush1.bf16.msra.mxu0 %v317
    %339 = vmatprep.subr.bf16.mxu0 0
    %340 = vmatpush1.bf16.msra.mxu0 %v318
    %341 = vmatprep.subr.bf16.mxu0 0
    %342 = vmatpush1.bf16.msra.mxu0 %v319
    %343 = vmatprep.subr.bf16.mxu0 0
    %344 = vmatpush1.bf16.msra.mxu0 %v320
    %345 = vmatprep.subr.bf16.mxu0 0
    %346 = vmatpush1.bf16.msra.mxu0 0
    %347 = vmatprep.subr.bf16.mxu0 0
    %348 = vmatpush1.bf16.msra.mxu0 0
    %349 = vmatprep.subr.bf16.mxu0 0
    %350 = vmatpush1.bf16.msra.mxu0 0
    %351 = vmatprep.subr.bf16.mxu0 0
    %352 = vmatpush1.bf16.msra.mxu0 0
    %353 = vmatprep.subr.bf16.mxu0 0
    %354 = vmatpush1.bf16.msra.mxu0 0
    %355 = vmatprep.subr.bf16.mxu0 0
    %356 = vmatpush1.bf16.msra.mxu0 0
    %357 = vmatprep.subr.bf16.mxu0 0
    %358 = vmatpush1.bf16.msra.mxu0 0
    %359 = vmatprep.subr.bf16.mxu0 0
    %360 = vmatpush1.bf16.msra.mxu0 0
    %361 = vmatprep.mubr.bf16.mxu0 0
    %362 = vmatmul.mubr.bf16.gmra.mrb[0].mxu0 %v260
    %v363 = vpop.f32.mrb[0].mxu0
    %v364 = vadd.f32 %v280, %v363
    %v365 = vpop.f32.mrb[0].mxu0
    %v366 = vpop.f32.mrb[0].mxu0
    %v367 = vpop.f32.mrb[0].mxu0
    %368 = vdwg.mxu0
    %369 = vst [vmem:[#allocation2] sm:$0xff] %v364
    // Predicated region
    $region22: #{usernet_forward.1} parent=1 // pred_check
      _
    $region23: #{usernet_forward.1} parent=1 // pred_check_branch
      %371 = sbr.rel (0) target = $region25
    $region24: #{usernet_forward.1} parent=1 // pred_region
      %s373 = ssub.s32 128, 128
      %374 = vsyncadd [#allocation3], %s373
      %s376 = sshll.u32 [#allocation2], 4
      %s377 = int_to_ptr.vmem [resolvable:$true] %s376
      %379 = dma.vmem_to_hbm [thread:$0]  %s377, 128, %s5, [#allocation3]
    $region25: #{usernet_forward.1} parent=1 // pred_fallthru
      _
    // Predicated region
    $region26: #{usernet_forward.1} parent=1 // pred_check
      _
    $region27: #{usernet_forward.1} parent=1 // pred_check_branch
      %381 = sbr.rel (0) target = $region29
    $region28: #{usernet_forward.1} parent=1 // pred_region
      %382 = dma.done [#allocation3], 128
    $region29: #{usernet_forward.1} parent=1 // pred_fallthru
      _
    %383 = vsyncpa [#allocation3], 1

</llo_original>
